<compile_context>
chip_gen: v6e
topology: v6e:2x2x1
jax: 0.10.0
libtpu: 0.0.40
codegen_flags: <defaults>
</compile_context>

<pallas_src>
import math

import jax
import jax.numpy as jnp
from jax import lax
from jax.experimental import pallas as pl
from jax.experimental.pallas import tpu as pltpu


def _round_up(x, m):
    return ((x + m - 1) // m) * m


def _largest_divisor_tile(n, align, cap):
    """Largest t <= cap with t % align == 0 and n % t == 0, else None."""
    best = None
    t = align
    while t <= min(n, cap):
        if n % t == 0:
            best = t
        t += align
    return best


def _token_embed_kernel(p_ref, w_ref, o_ref):
    # (K, tm) contracted with (K, td) over dim 0 -> (tm, td) on the MXU.
    # Transposed-LHS feed is native to the MXU; no in-kernel transpose.
    o_ref[...] = lax.dot_general(
        p_ref[...], w_ref[...],
        dimension_numbers=(((0,), (0,)), ((), ())),
        preferred_element_type=jnp.float32,
    ).astype(o_ref.dtype)


@jax.jit
def token_embedding(x, weight):
    """
    x:      (B, L, C) float32
    weight: (D, C, 3) float32  -- PyTorch Conv1d weight layout (out, in, kernel)
    returns (B, L, D) float32
    """
    B, L, C = x.shape
    D = weight.shape[0]
    K = 3 * C
    M = B * L

    # --- circular pad (1 each side) + im2col, built directly in (K, M) layout:
    #     patches_T[k*C + c, b*L + l] = xp[b, l + k, c]
    # TODO(synk): could be fused into the kernel with halo tiles; kept in XLA
    # since the K = 3*C slab is small next to the (M, D) output traffic.
    xp = jnp.concatenate([x[:, -1:, :], x, x[:, :1, :]], axis=1)          # (B, L+2, C)
    shifts = jnp.stack(
        [xp[:, 0:L, :], xp[:, 1:L + 1, :], xp[:, 2:L + 2, :]], axis=0)     # (3, B, L, C)
    patches_T = jnp.transpose(shifts, (0, 3, 1, 2)).reshape(K, M)          # (K, M)

    # Conv1d weight (D, C, 3) -> (K, D), same [k-major, c-minor] ordering.
    w2 = jnp.transpose(weight, (2, 1, 0)).reshape(K, D)

    # bf16 operands for the MXU; accumulation / output stay f32.
    patches_T = patches_T.astype(jnp.bfloat16)
    w2 = w2.astype(jnp.bfloat16)

    # --- D tile: keep the full D per block unless d_model is large & 128-aligned.
    if D % 128 == 0 and D > 512:
        td = _largest_divisor_tile(D, 128, 512) or D
    else:
        td = D                            # block dim == full dim: (8,128) rule OK
    nd = D // td

    # --- M tile: exact divisor of M (no pad, no post-slice), VMEM-budgeted,
    # and keep >= ~8 blocks for v7x dual-TC pipelining when M is large enough.
    in_b, out_b = 2, 4                                   # bf16 in, f32 out
    budget = 16 * 1024 * 1024 - 2 * K * td * in_b        # <= v5e scoped default
    per_row = 2 * (K * in_b + td * out_b)                # double-buffered tiles
    tm_cap = max(128, (budget // per_row) // 128 * 128)
    tm_cap = min(tm_cap, 2048)
    if M >= 8 * 128:
        tm_cap = min(tm_cap, max(128, (M // 8) // 128 * 128))

    tm = _largest_divisor_tile(M, 128, tm_cap)
    if tm is not None:
        Mp = M
    elif M <= tm_cap:
        tm, Mp = M, M                     # single block; block dim == full dim
    else:
        # Ragged M: the only remaining case that pads + slices.
        tm = min(tm_cap, _round_up(M, 128))
        Mp = _round_up(M, tm)
        patches_T = jnp.pad(patches_T, ((0, 0), (0, Mp - M)))

    if nd == 1:
        grid = (Mp // tm,)
        in_specs = [
            pl.BlockSpec((K, tm), lambda i: (0, i)),
            # Constant block index: Pallas keeps the weight VMEM-resident and
            # skips re-fetches across grid steps; the redundant second buffer
            # is only K*D*2 bytes here, so the Buffered(1) knob isn't needed.
            pl.BlockSpec((K, D), lambda i: (0, 0)),
        ]
        out_specs = pl.BlockSpec((tm, D), lambda i: (i, 0))
        dims = ("parallel",)
    else:
        grid = (Mp // tm, nd)
        in_specs = [
            pl.BlockSpec((K, tm), lambda i, j: (0, i)),
            pl.BlockSpec((K, td), lambda i, j: (0, j)),
        ]
        out_specs = pl.BlockSpec((tm, td), lambda i, j: (i, j))
        dims = ("parallel", "parallel")

    out = pl.pallas_call(
        _token_embed_kernel,
        out_shape=jax.ShapeDtypeStruct((Mp, D), jnp.float32),
        grid=grid,
        in_specs=in_specs,
        out_specs=out_specs,
        compiler_params=pltpu.CompilerParams(dimension_semantics=dims),
        cost_estimate=pl.CostEstimate(
            flops=2 * Mp * K * D,
            transcendentals=0,
            bytes_accessed=in_b * (nd * Mp * K + K * D) + out_b * Mp * D,
        ),
    )(patches_T, w2)

    if Mp != M:
        out = out[:M]
    return out.reshape(B, L, D)


def _reference(x, weight):
    """Pure-JAX reference: circular-padded Conv1d (no Pallas)."""
    B, L, C = x.shape
    D = weight.shape[0]
    xc = jnp.transpose(x, (0, 2, 1))                                    # (B, C, L)
    xpad = jnp.concatenate([xc[:, :, -1:], xc, xc[:, :, :1]], axis=-1)  # (B, C, L+2)
    out = jnp.zeros((B, D, L), jnp.float32)
    for k in range(3):
        out = out + jnp.einsum(
            "dc,bcl->bdl", weight[:, :, k], xpad[:, :, k:k + L],
            precision="highest",
        )
    return jnp.transpose(out, (0, 2, 1))                                # (B, L, D)


if __name__ == "__main__":
    # Small shapes consistent with the module (time-series encoder input);
    # M = B*L = 1024 gives an 8-step grid (real pipelining / megacore path).
    B, L, C = 2, 512, 4          # batch, seq_len, c_in
    d_model = 32

    key = jax.random.PRNGKey(0)
    kx, kw = jax.random.split(key)

    x = jax.random.normal(kx, (B, L, C), dtype=jnp.float32)

    # kaiming_normal_(mode='fan_in', nonlinearity='leaky_relu') as in the module.
    fan_in = C * 3
    gain = math.sqrt(2.0 / (1.0 + 0.01 ** 2))
    std = gain / math.sqrt(fan_in)
    w = std * jax.random.normal(kw, (d_model, C, 3), dtype=jnp.float32)

    out = jax.block_until_ready(token_embedding(x, w))

    # Tight check vs a reference fed the same bf16-rounded inputs (the kernel
    # feeds the MXU bf16 and accumulates in f32), plus a loose sanity check
    # against the pure-f32 module semantics.
    x_bf = x.astype(jnp.bfloat16).astype(jnp.float32)
    w_bf = w.astype(jnp.bfloat16).astype(jnp.float32)
    ref_bf = jax.block_until_ready(_reference(x_bf, w_bf))
    ref_f32 = jax.block_until_ready(_reference(x, w))

    assert out.shape == (B, L, d_model), out.shape
    assert jnp.allclose(out, ref_bf, atol=1e-4, rtol=1e-4), "mismatch vs bf16-input reference"
    assert float(jnp.max(jnp.abs(out - ref_f32))) < 0.1, "mismatch vs f32 reference"

    print("KERNEL_OK")
</pallas_src>

<mosaic_0001>
module attributes {stable_mosaic.version = 11 : i64} {
  func.func @_token_embed_kernel(%arg0: i32, %arg1: memref<12x128xbf16, #tpu.memory_space<vmem>>, %arg2: memref<12x32xbf16, #tpu.memory_space<vmem>>, %arg3: memref<128x32xf32, #tpu.memory_space<vmem>>) attributes {dimension_semantics = [#tpu.dimension_semantics<parallel>], iteration_bounds = array<i64: 8>, scalar_prefetch = 0 : i64, scratch_operands = 0 : i64, tpu.core_type = #tpu.core_type<tc>, window_params = [{transform_indices = @transform_0, window_bounds = array<i64: 12, 128>}, {pipeline_mode = #tpu.pipeline_mode<synchronous>, transform_indices = @transform_1, window_bounds = array<i64: 12, 32>}, {transform_indices = @transform_2, window_bounds = array<i64: 128, 32>}]} {
    %c0 = arith.constant 0 : index
    %c0_0 = arith.constant 0 : index
    %0 = vector.load %arg1[%c0, %c0_0] : memref<12x128xbf16, #tpu.memory_space<vmem>>, vector<12x128xbf16>
    %c0_1 = arith.constant 0 : index
    %c0_2 = arith.constant 0 : index
    %1 = vector.load %arg2[%c0_1, %c0_2] : memref<12x32xbf16, #tpu.memory_space<vmem>>, vector<12x32xbf16>
    %cst = arith.constant dense<0.000000e+00> : vector<128x32xf32>
    %2 = tpu.matmul %0, %1, %cst {dimension_numbers = #tpu.dot_dimension_numbers<[0], [0], [1], [1], [0, 1, 1, 1], [], []>} : vector<12x128xbf16>, vector<12x32xbf16>, vector<128x32xf32> -> vector<128x32xf32>
    %c0_3 = arith.constant 0 : index
    %c0_4 = arith.constant 0 : index
    %3 = vector.load %arg3[%c0_3, %c0_4] : memref<128x32xf32, #tpu.memory_space<vmem>>, vector<128x32xf32>
    tpu.vector_store %arg3[%c0_3, %c0_4], %2 {strides = array<i32>} : memref<128x32xf32, #tpu.memory_space<vmem>>, vector<128x32xf32>,
    return
  }
  func.func @transform_0(%arg0: i32) -> (i32, i32) {
    %c0_i32 = arith.constant 0 : i32
    %c0_i32_0 = arith.constant 0 : i32
    return %c0_i32, %arg0 : i32, i32
  }
  func.func @transform_1(%arg0: i32) -> (i32, i32) {
    %c0_i32 = arith.constant 0 : i32
    %c0_i32_0 = arith.constant 0 : i32
    %c0_i32_1 = arith.constant 0 : i32
    return %c0_i32, %c0_i32_0 : i32, i32
  }
  func.func @transform_2(%arg0: i32) -> (i32, i32) {
    %c0_i32 = arith.constant 0 : i32
    %c0_i32_0 = arith.constant 0 : i32
    return %arg0, %c0_i32 : i32, i32
  }
}

</mosaic_0001>

<llo_original>
// kernel: token_embedding.1
$region0: #{token_embedding.1}
  #allocation0 [shape = 'u32[]', space=smem, size = 0x4, offset = 0x4, fixed_abs, tag = 'smem constant byte address 0x4 - core index']
  #allocation1 [shape = 'u32[144,128]{1,0:T(1,128)}', space=vmem, size = 0x12000, scoped, tag = 'internal scratch']
  %s0 = inlined_call_operand.vmem [shape: bf16[12,1024], index: 0, kind: input, shape index: {}]
  %s1 = inlined_call_operand.vmem [shape: bf16[12,32], index: 1, kind: input, shape index: {}]
  %s2 = inlined_call_operand.vmem [shape: f32[1024,32], index: 2, kind: output, shape index: {}]
  %s3 = sld [smem:[#allocation0]]
  $region82: #{token_embedding.1} parent=0
    _
  %s5 = ssub.s32 1, %s3
  %s6 = scalar_select 0, %s5, %s3
  $region1: #{token_embedding.1} parent=0
    #allocation2 [shape = 'u8[8192]{0}', space=vmem, size = 0x2000, scoped, tag = 'input window, operand 0']
    loop: start=0, step=1, limit=10
    $region2: #{token_embedding.1} parent=1 // loop_pre_header
      _
    $region3: #{token_embedding.1} parent=1 // loop_header
      %s8 = sphi 0, %s12
      %p9 = scmp.ge.s32.totalorder %s8, 10
      %s18 = sphi 0, %s20
      %s21 = sphi 0, %s18
      %s22 = sphi 0, %s21
      %s38 = sphi 0, %s22
      %s42 = sphi 0, %s42
      %s44 = sphi 0, %s42
      %s45 = sphi 0, %s44
      %s59 = sphi 0, %s45
      %s65 = sphi 0, %s67
      %s68 = sphi 0, %s65
      %s69 = sphi 0, %s68
      %s85 = sphi 0, %s69
    $region4: #{token_embedding.1} parent=1 // loop_header_branch
      %11 = sbr.rel (%p9) target = $region8
    $region5: #{token_embedding.1} parent=1 // loop_body
      %s13 = ssub.s32 %s8, 1
      %s14 = ssub.s32 %s8, 2
      %s15 = sadd.s32 %s8, 1
      %s16 = ssub.s32 %s8, %s15
      %p17 = scmp.eq.s32.totalorder %s16, 0
      %s19 = sadd.s32 %s18, 1
      %s20 = scalar_select %p17, %s18, %s19
      %p23 = pneg %p17
      %p24 = scmp.eq.s32.totalorder %s8, 7
      %p25 = por %p23, %p24
      %p26 = scmp.ne.s32.totalorder %s18, %s21
      %p27 = scmp.eq.s32.totalorder %s8, 0
      %p28 = por %p26, %p27
      %p29 = scmp.ne.s32.totalorder %s18, %s21
      %p30 = scmp.eq.s32.totalorder %s13, 7
      %p31 = por %p29, %p30
      %p32 = scmp.ne.s32.totalorder %s21, %s22
      %p33 = scmp.eq.s32.totalorder %s13, 0
      %p34 = por %p32, %p33
      %p35 = scmp.ne.s32.totalorder %s21, %s22
      %p36 = scmp.eq.s32.totalorder %s14, 7
      %p37 = por %p35, %p36
      %p39 = scmp.ne.s32.totalorder %s22, %s38
      %p40 = scmp.eq.s32.totalorder %s14, 0
      %p41 = por %p39, %p40
      %s43 = sadd.s32 %s42, 1
      %p46 = scmp.eq.s32.totalorder %s8, 7
      %p47 = scmp.ne.s32.totalorder %s42, %s44
      %p48 = scmp.eq.s32.totalorder %s8, 0
      %p49 = por %p47, %p48
      %p50 = scmp.ne.s32.totalorder %s42, %s44
      %p51 = scmp.eq.s32.totalorder %s13, 7
      %p52 = por %p50, %p51
      %p53 = scmp.ne.s32.totalorder %s44, %s45
      %p54 = scmp.eq.s32.totalorder %s13, 0
      %p55 = por %p53, %p54
      %p56 = scmp.ne.s32.totalorder %s44, %s45
      %p57 = scmp.eq.s32.totalorder %s14, 7
      %p58 = por %p56, %p57
      %p60 = scmp.ne.s32.totalorder %s45, %s59
      %p61 = scmp.eq.s32.totalorder %s14, 0
      %p62 = por %p60, %p61
      %s63 = ssub.s32 %s8, %s15
      %p64 = scmp.eq.s32.totalorder %s63, 0
      %s66 = sadd.s32 %s65, 1
      %s67 = scalar_select %p64, %s65, %s66
      %p70 = pneg %p64
      %p71 = scmp.eq.s32.totalorder %s8, 7
      %p72 = por %p70, %p71
      %p73 = scmp.ne.s32.totalorder %s65, %s68
      %p74 = scmp.eq.s32.totalorder %s8, 0
      %p75 = por %p73, %p74
      %p76 = scmp.ne.s32.totalorder %s65, %s68
      %p77 = scmp.eq.s32.totalorder %s13, 7
      %p78 = por %p76, %p77
      %p79 = scmp.ne.s32.totalorder %s68, %s69
      %p80 = scmp.eq.s32.totalorder %s13, 0
      %p81 = por %p79, %p80
      %p82 = scmp.ne.s32.totalorder %s68, %s69
      %p83 = scmp.eq.s32.totalorder %s14, 7
      %p84 = por %p82, %p83
      %p86 = scmp.ne.s32.totalorder %s69, %s85
      %p87 = scmp.eq.s32.totalorder %s14, 0
      %p88 = por %p86, %p87
      %p89 = scmp.le.s32.totalorder 1, %s8
      %p90 = scmp.lt.s32.totalorder %s8, 9
      %p91 = pnand %p89, %p90
      %p92 = pneg %p91
      // Predicated region
      $region9: #{token_embedding.1} parent=5 // pred_check
        _
      $region10: #{token_embedding.1} parent=5 // pred_check_branch
        %94 = sbr.rel (%p91) target = $region12
      $region11: #{token_embedding.1} parent=5 // pred_region
        %s95 = ssub.s32 %s8, 1
        // Predicated region
        $region13: #{token_embedding.1} parent=11 // pred_check
          %p96 = pneg %p55
        $region14: #{token_embedding.1} parent=11 // pred_check_branch
          %98 = sbr.rel (%p96) target = $region16
        $region15: #{token_embedding.1} parent=11 // pred_region
          _
        $region16: #{token_embedding.1} parent=11 // pred_fallthru
          _
      $region12: #{token_embedding.1} parent=5 // pred_fallthru
        _
      %p99 = scmp.lt.s32.totalorder %s8, 8
      // Predicated region
      $region17: #{token_embedding.1} parent=5 // pred_check
        %p100 = pneg %p99
      $region18: #{token_embedding.1} parent=5 // pred_check_branch
        %102 = sbr.rel (%p100) target = $region20
      $region19: #{token_embedding.1} parent=5 // pred_region
        // Predicated region
        $region21: #{token_embedding.1} parent=19 // pred_check
          %p103 = pneg %p28
        $region22: #{token_embedding.1} parent=19 // pred_check_branch
          %105 = sbr.rel (%p103) target = $region24
        $region23: #{token_embedding.1} parent=19 // pred_region
          %s106 = sand.u32 %s18, 1
          %s107 = sand.u32 %s18, 1
          %s108 = smul.addr %s107, 8
          %s109 = scalar_lea.vmem [#allocation2], %s108
          %s110 = smul.addr %s8, 4
          %s111 = scalar_lea.vmem %s0, %s110
          // Predicated region
          $region25: #{token_embedding.1} parent=23 // pred_check
            _
          $region26: #{token_embedding.1} parent=23 // pred_check_branch
            %113 = sbr.rel (0) target = $region28
          $region27: #{token_embedding.1} parent=23 // pred_region
            // Predicated region
            $region29: #{token_embedding.1} parent=27 // pred_check
              _
            $region30: #{token_embedding.1} parent=27 // pred_check_branch
              %115 = sbr.rel target = $region32
            $region31: #{token_embedding.1} parent=27 // pred_region
              // Predicated region
              $region44: #{token_embedding.1} parent=31 // pred_check
                _
              $region45: #{token_embedding.1} parent=31 // pred_check_branch
                %133 = sbr.rel (0) target = $region47
              $region46: #{token_embedding.1} parent=31 // pred_region
                loop: start=0, step=1, limit=1
                $region48: #{token_embedding.1} parent=46 // loop_pre_header
                  _
                $region49: #{token_embedding.1} parent=46 // loop_header
                  %s135 = sphi 0, %s139
                  %p136 = scmp.ge.s32.totalorder %s135, 1
                  %s140 = sphi %s111, %s111
                  %s141 = sphi %s109, %s109
                $region50: #{token_embedding.1} parent=46 // loop_header_branch
                  %138 = sbr.rel (%p136) target = $region54
                $region51: #{token_embedding.1} parent=46 // loop_body
                  _
                $region52: #{token_embedding.1} parent=46 // loop_footer
                  %s139 = sadd.s32 1, %s135
                $region53: #{token_embedding.1} parent=46 // loop_footer_branch
                  %134 = sbr.rel target = $region49
                $region54: #{token_embedding.1} parent=46 // loop_exit
                  _
                %s143 = ssub.s32 16, 1
                loop: start=0, step=1, limit=1
                $region55: #{token_embedding.1} parent=46 // loop_pre_header
                  _
                $region56: #{token_embedding.1} parent=46 // loop_header
                  %s145 = sphi 0, %s149
                  %p146 = scmp.ge.s32.totalorder %s145, 1
                  %s150 = sphi %s111, %s111
                  %s151 = sphi %s109, %s109
                $region57: #{token_embedding.1} parent=46 // loop_header_branch
                  %148 = sbr.rel (%p146) target = $region61
                $region58: #{token_embedding.1} parent=46 // loop_body
                  %v152 = vld [vmem:[%s150] sm:%s143]
                  %153 = vst [vmem:[%s151] sm:%s143] %v152
                  %v154 = vld [vmem:[%s150 + $0x20] sm:%s143]
                  %155 = vst [vmem:[%s151 + $0x4] sm:%s143] %v154
                $region59: #{token_embedding.1} parent=46 // loop_footer
                  %s149 = sadd.s32 1, %s145
                $region60: #{token_embedding.1} parent=46 // loop_footer_branch
                  %144 = sbr.rel target = $region56
                $region61: #{token_embedding.1} parent=46 // loop_exit
                  _
              $region47: #{token_embedding.1} parent=31 // pred_fallthru
                _
            $region32: #{token_embedding.1} parent=27 // pred_fallthru
              _
            // Predicated region
            $region33: #{token_embedding.1} parent=27 // pred_check
              _
            $region34: #{token_embedding.1} parent=27 // pred_check_branch
              %117 = sbr.rel (0) target = $region36
            $region35: #{token_embedding.1} parent=27 // pred_region
              %s119 = ssub.s32 16, 1
              loop: start=0, step=1, limit=1
              $region37: #{token_embedding.1} parent=35 // loop_pre_header
                _
              $region38: #{token_embedding.1} parent=35 // loop_header
                %s121 = sphi 0, %s125
                %p122 = scmp.ge.s32.totalorder %s121, 1
                %s126 = sphi %s111, %s111
                %s127 = sphi %s109, %s109
              $region39: #{token_embedding.1} parent=35 // loop_header_branch
                %124 = sbr.rel (%p122) target = $region43
              $region40: #{token_embedding.1} parent=35 // loop_body
                %v128 = vld [vmem:[%s126] sm:%s119]
                %129 = vst [vmem:[%s127] sm:%s119] %v128
                %v130 = vld [vmem:[%s126 + $0x20] sm:%s119]
                %131 = vst [vmem:[%s127 + $0x4] sm:%s119] %v130
              $region41: #{token_embedding.1} parent=35 // loop_footer
                %s125 = sadd.s32 1, %s121
              $region42: #{token_embedding.1} parent=35 // loop_footer_branch
                %120 = sbr.rel target = $region38
              $region43: #{token_embedding.1} parent=35 // loop_exit
                _
            $region36: #{token_embedding.1} parent=27 // pred_fallthru
              _
          $region28: #{token_embedding.1} parent=23 // pred_fallthru
            _
          %156 = vnop
        $region24: #{token_embedding.1} parent=19 // pred_fallthru
          _
      $region20: #{token_embedding.1} parent=5 // pred_fallthru
        _
      %p157 = scmp.le.s32.totalorder 1, %s8
      %p158 = scmp.lt.s32.totalorder %s8, 9
      %p159 = pnand %p157, %p158
      %p160 = pneg %p159
      // Predicated region
      $region62: #{token_embedding.1} parent=5 // pred_check
        _
      $region63: #{token_embedding.1} parent=5 // pred_check_branch
        %162 = sbr.rel (%p159) target = $region65
      $region64: #{token_embedding.1} parent=5 // pred_region
        %s163 = ssub.s32 %s8, 1
        %s164 = sand.u32 %s21, 1
        %s165 = sand.u32 %s21, 1
        %s166 = smul.addr %s165, 8
        %s167 = scalar_lea.vmem [#allocation2], %s166
        // Predicated region
        $region66: #{token_embedding.1} parent=64 // pred_check
          %p168 = pneg %p34
        $region67: #{token_embedding.1} parent=64 // pred_check_branch
          %170 = sbr.rel (%p168) target = $region69
        $region68: #{token_embedding.1} parent=64 // pred_region
          _
        $region69: #{token_embedding.1} parent=64 // pred_fallthru
          _
        %s171 = sand.u32 %s21, 1
        %s172 = sand.u32 %s21, 1
        %s173 = smul.addr %s172, 8
        %s174 = scalar_lea.vmem [#allocation2], %s173
        %p175 = pneg %p34
        %p176 = pneg %p31
        %p177 = pneg %p55
        %p178 = pneg %p52
        %p179 = pneg %p81
        %p180 = pneg %p78
        %s181 = smul.u32 16, %s13
        %p182 = scmp.lt.s32.totalorder %s181, 127
        %s183 = scalar_select %p182, %s181, 127
        %s184 = smul.addr %s183, 8
        %s185 = scalar_lea.vmem %s2, %s184
        %s186 = smul.u32 16, %s13
        %p187 = scmp.lt.s32.totalorder %s186, 127
        %s188 = scalar_select %p187, %s186, 127
        %s189 = smul.addr %s188, 8
        %s190 = scalar_lea.vmem %s2, %s189
        %s191 = smul.u32 16, %s13
        %v193 = vld [vmem:[%s167] sm:$0xf]
        %v194 = vld [vmem:[%s167 + $0x4] sm:$0x3]
        %v195 = vld [vmem:[%s1] sm:$0xf]
        %v196 = vld [vmem:[%s1 + $0x4] sm:$0x3]
        %v199 = vunpack.c.l.b16 %v193
        %v200 = vunpack.c.l.b16 %v194
        %v201 = vpack.c.b16 %v200, %v199
        %203 = vxpose.xlu0.c.b16.start [1/8] %v201, 128
        %204 = vxpose.xlu0.c.b16.cont [2/8] 0, 128
        %205 = vxpose.xlu0.c.b16.cont [3/8] 0, 128
        %206 = vxpose.xlu0.c.b16.cont [4/8] 0, 128
        %207 = vxpose.xlu0.c.b16.cont [5/8] 0, 128
        %208 = vxpose.xlu0.c.b16.cont [6/8] 0, 128
        %209 = vxpose.xlu0.c.b16.cont [7/8] 0, 128
        %210 = vxpose.xlu0.c.b16.end [8/8] 0, 128
        %v211 = vpop.trf.xlu0
        %v212 = vpop.trf.xlu0
        %v213 = vpop.trf.xlu0
        %v214 = vpop.trf.xlu0
        %v215 = vpop.trf.xlu0
        %v216 = vpop.trf.xlu0
        %v217 = vpop.trf.xlu0
        %v218 = vpop.trf.xlu0
        %v221 = vunpack.c.l.b16 %v195
        %v222 = vunpack.c.l.b16 %v196
        %v223 = vpack.c.b16 %v222, %v221
        %vm224 = vcmask 97280
        %v226 = vsel %vm224, %v211, 0
        %v229 = vsel %vm224, %v212, 0
        %v232 = vsel %vm224, %v213, 0
        %v235 = vsel %vm224, %v214, 0
        %v238 = vsel %vm224, %v215, 0
        %v241 = vsel %vm224, %v216, 0
        %v244 = vsel %vm224, %v217, 0
        %v247 = vsel %vm224, %v218, 0
        %vm249 = vcmask 1045504
        %v251 = vsel %vm249, %v223, 0
        %253 = vmatprep.subr.bf16.mxu0 0
        %254 = vmatpush1.bf16.msra.mxu0 0
        %255 = vmatprep.subr.bf16.mxu0 0
        %256 = vmatpush1.bf16.msra.mxu0 0
        %257 = vmatprep.subr.bf16.mxu0 0
        %258 = vmatpush1.bf16.msra.mxu0 0
        %259 = vmatprep.subr.bf16.mxu0 0
        %260 = vmatpush1.bf16.msra.mxu0 0
        %261 = vmatprep.subr.bf16.mxu0 0
        %262 = vmatpush1.bf16.msra.mxu0 0
        %263 = vmatprep.subr.bf16.mxu0 0
        %264 = vmatpush1.bf16.msra.mxu0 0
        %265 = vmatprep.subr.bf16.mxu0 0
        %266 = vmatpush1.bf16.msra.mxu0 0
        %267 = vmatprep.subr.bf16.mxu0 0
        %268 = vmatpush1.bf16.msra.mxu0 %v251
        %269 = vmatprep.subr.bf16.mxu0 0
        %270 = vmatpush2.bf16.msra.mxu0 0
        %271 = vmatprep.subr.bf16.mxu0 0
        %272 = vmatpush2.bf16.msra.mxu0 0
        %273 = vmatprep.subr.bf16.mxu0 0
        %274 = vmatpush2.bf16.msra.mxu0 0
        %275 = vmatprep.subr.bf16.mxu0 0
        %276 = vmatpush2.bf16.msra.mxu0 0
        %277 = vmatprep.subr.bf16.mxu0 0
        %278 = vmatpush2.bf16.msra.mxu0 0
        %279 = vmatprep.subr.bf16.mxu0 0
        %280 = vmatpush2.bf16.msra.mxu0 0
        %281 = vmatprep.subr.bf16.mxu0 0
        %282 = vmatpush2.bf16.msra.mxu0 0
        %283 = vmatprep.subr.bf16.mxu0 0
        %284 = vmatpush2.bf16.msra.mxu0 0
        %285 = vmatprep.mubr.bf16.mxu0 0
        %286 = vmatmul.mubr.bf16.gmra.mxu0 %v226
        %v287 = vpop.f32.mrf.mxu0
        %v288 = vadd.f32 0.0, %v287
        %v289 = vpop.f32.mrf.mxu0
        %v290 = vpop.f32.mrf.mxu0
        %v291 = vadd.f32 0.0, %v290
        %v292 = vpop.f32.mrf.mxu0
        %293 = vmatprep.mubr.bf16.mxu0 0
        %294 = vmatmul.mubr.bf16.gmra.mxu0 %v229
        %v295 = vpop.f32.mrf.mxu0
        %v296 = vadd.f32 0.0, %v295
        %v297 = vpop.f32.mrf.mxu0
        %v298 = vpop.f32.mrf.mxu0
        %v299 = vadd.f32 0.0, %v298
        %v300 = vpop.f32.mrf.mxu0
        %301 = vmatprep.mubr.bf16.mxu0 0
        %302 = vmatmul.mubr.bf16.gmra.mxu0 %v232
        %v303 = vpop.f32.mrf.mxu0
        %v304 = vadd.f32 0.0, %v303
        %v305 = vpop.f32.mrf.mxu0
        %v306 = vpop.f32.mrf.mxu0
        %v307 = vadd.f32 0.0, %v306
        %v308 = vpop.f32.mrf.mxu0
        %309 = vmatprep.mubr.bf16.mxu0 0
        %310 = vmatmul.mubr.bf16.gmra.mxu0 %v235
        %v311 = vpop.f32.mrf.mxu0
        %v312 = vadd.f32 0.0, %v311
        %v313 = vpop.f32.mrf.mxu0
        %v314 = vpop.f32.mrf.mxu0
        %v315 = vadd.f32 0.0, %v314
        %v316 = vpop.f32.mrf.mxu0
        %317 = vmatprep.mubr.bf16.mxu0 0
        %318 = vmatmul.mubr.bf16.gmra.mxu0 %v238
        %v319 = vpop.f32.mrf.mxu0
        %v320 = vadd.f32 0.0, %v319
        %v321 = vpop.f32.mrf.mxu0
        %v322 = vpop.f32.mrf.mxu0
        %v323 = vadd.f32 0.0, %v322
        %v324 = vpop.f32.mrf.mxu0
        %325 = vmatprep.mubr.bf16.mxu0 0
        %326 = vmatmul.mubr.bf16.gmra.mxu0 %v241
        %v327 = vpop.f32.mrf.mxu0
        %v328 = vadd.f32 0.0, %v327
        %v329 = vpop.f32.mrf.mxu0
        %v330 = vpop.f32.mrf.mxu0
        %v331 = vadd.f32 0.0, %v330
        %v332 = vpop.f32.mrf.mxu0
        %333 = vmatprep.mubr.bf16.mxu0 0
        %334 = vmatmul.mubr.bf16.gmra.mxu0 %v244
        %v335 = vpop.f32.mrf.mxu0
        %v336 = vadd.f32 0.0, %v335
        %v337 = vpop.f32.mrf.mxu0
        %v338 = vpop.f32.mrf.mxu0
        %v339 = vadd.f32 0.0, %v338
        %v340 = vpop.f32.mrf.mxu0
        %341 = vmatprep.mubr.bf16.mxu0 0
        %342 = vmatmul.mubr.bf16.gmra.mxu0 %v247
        %v343 = vpop.f32.mrf.mxu0
        %v344 = vadd.f32 0.0, %v343
        %v345 = vpop.f32.mrf.mxu0
        %v346 = vpop.f32.mrf.mxu0
        %v347 = vadd.f32 0.0, %v346
        %v348 = vpop.f32.mrf.mxu0
        %349 = vdwg.mxu0
        %vm350 = vcmask 261120
        %351 = vst.msk [vmem:[%s190] sm:$0xff] %vm350, %v288
        %352 = vst.msk [vmem:[%s190 + $0x8] sm:$0xff] %vm350, %v291
        %353 = vst.msk [vmem:[%s190 + $0x10] sm:$0xff] %vm350, %v296
        %354 = vst.msk [vmem:[%s190 + $0x18] sm:$0xff] %vm350, %v299
        %355 = vst.msk [vmem:[%s190 + $0x20] sm:$0xff] %vm350, %v304
        %356 = vst.msk [vmem:[%s190 + $0x28] sm:$0xff] %vm350, %v307
        %357 = vst.msk [vmem:[%s190 + $0x30] sm:$0xff] %vm350, %v312
        %358 = vst.msk [vmem:[%s190 + $0x38] sm:$0xff] %vm350, %v315
        %359 = vst.msk [vmem:[%s190 + $0x40] sm:$0xff] %vm350, %v320
        %360 = vst.msk [vmem:[%s190 + $0x48] sm:$0xff] %vm350, %v323
        %361 = vst.msk [vmem:[%s190 + $0x50] sm:$0xff] %vm350, %v328
        %362 = vst.msk [vmem:[%s190 + $0x58] sm:$0xff] %vm350, %v331
        %363 = vst.msk [vmem:[%s190 + $0x60] sm:$0xff] %vm350, %v336
        %364 = vst.msk [vmem:[%s190 + $0x68] sm:$0xff] %vm350, %v339
        %365 = vst.msk [vmem:[%s190 + $0x70] sm:$0xff] %vm350, %v344
        %366 = vst.msk [vmem:[%s190 + $0x78] sm:$0xff] %vm350, %v347
        %s367 = smul.u32 16, %s13
        %p368 = scmp.lt.s32.totalorder %s367, 127
        %s369 = scalar_select %p368, %s367, 127
        %s370 = smul.addr %s369, 8
        %s371 = scalar_lea.vmem %s2, %s370
        // Predicated region
        $region70: #{token_embedding.1} parent=64 // pred_check
          %p372 = pneg %p78
        $region71: #{token_embedding.1} parent=64 // pred_check_branch
          %374 = sbr.rel (%p372) target = $region73
        $region72: #{token_embedding.1} parent=64 // pred_region
          %s375 = smul.u32 16, %s13
        $region73: #{token_embedding.1} parent=64 // pred_fallthru
          _
      $region65: #{token_embedding.1} parent=5 // pred_fallthru
        _
      %p376 = scmp.le.s32.totalorder 2, %s8
      // Predicated region
      $region74: #{token_embedding.1} parent=5 // pred_check
        %p377 = pneg %p376
      $region75: #{token_embedding.1} parent=5 // pred_check_branch
        %379 = sbr.rel (%p377) target = $region77
      $region76: #{token_embedding.1} parent=5 // pred_region
        %s380 = ssub.s32 %s8, 2
        // Predicated region
        $region78: #{token_embedding.1} parent=76 // pred_check
          %p381 = pneg %p84
        $region79: #{token_embedding.1} parent=76 // pred_check_branch
          %383 = sbr.rel (%p381) target = $region81
        $region80: #{token_embedding.1} parent=76 // pred_region
          %s384 = smul.u32 16, %s14
          %p385 = scmp.lt.s32.totalorder %s384, 127
          %s386 = scalar_select %p385, %s384, 127
          %s387 = smul.addr %s386, 8
          %s388 = scalar_lea.vmem %s2, %s387
        $region81: #{token_embedding.1} parent=76 // pred_fallthru
          _
      $region77: #{token_embedding.1} parent=5 // pred_fallthru
        _
    $region6: #{token_embedding.1} parent=1 // loop_footer
      %s12 = sadd.s32 1, %s8
    $region7: #{token_embedding.1} parent=1 // loop_footer_branch
      %7 = sbr.rel target = $region3
    $region8: #{token_embedding.1} parent=1 // loop_exit
      _

</llo_original>
